<compile_context>
chip_gen: v5e
topology: v5e:2x2
jax: 0.10.0
libtpu: 0.0.40
codegen_flags: <defaults>
</compile_context>

<pallas_src>
import functools

import jax
import jax.numpy as jnp
from jax.experimental import pallas as pl
from jax.experimental.pallas import tpu as pltpu


def _round_up(x, m):
    return ((x + m - 1) // m) * m


def _cdiv(a, b):
    return -(-a // b)


# ---------------------------------------------------------------------------
# Kernel
# ---------------------------------------------------------------------------
def _attn_kernel(hidden_ref, enc_ref, mask_ref, wh_ref, b_ref, v_ref,
                 out_ref, hproj_scr, scores_scr, *, src_len):
    """One (batch-tile, source-tile) grid step of additive attention.

    hidden_ref: (Bt, Dh)      decoder hidden states          (compute dtype)
    enc_ref:    (St, Bt, D)   pre-projected encoder slab     (compute dtype)
    mask_ref:   (Bt, S_out)   int32, nonzero -> padding (S_out = ceil(S/128)*128)
    wh_ref:     (Dh, D)       weight slice acting on hidden  (compute dtype)
    b_ref:      (1, D)        bias (f32)
    v_ref:      (1, D)        score vector (f32)
    out_ref:    (Bt, S_out)   softmax attention weights (f32), lane-dense
    hproj_scr:  (Bt, D) f32   hidden @ Wh + b, computed once per batch tile
    scores_scr: (S_out, Bt) f32  scores accumulated across source tiles
    """
    s_idx = pl.program_id(1)
    n_s = pl.num_programs(1)
    St = enc_ref.shape[0]

    @pl.when(s_idx == 0)
    def _init():
        # Bias folded into the small (Bt, D) operand, not the (St, Bt, D) slab.
        hproj_scr[...] = (
            jnp.dot(hidden_ref[...], wh_ref[...],
                    preferred_element_type=jnp.float32) + b_ref[...])
        # Rows never written by a source tile stay far below -1e6 -> exp() == 0.
        scores_scr[...] = jnp.full(scores_scr.shape, -1e30, dtype=jnp.float32)

    # energy = tanh(e_proj + h_proj + b) in f32 (tanh rides the EUP; v5e has no
    # bf16 VPU/EUP path so elementwise math stays f32 on every generation).
    energy = jnp.tanh(enc_ref[...].astype(jnp.float32)
                      + hproj_scr[...][None, :, :])               # (St, Bt, D)

    # scores = v . energy : elementwise mul + lane reduce (no M=1 MXU matmul).
    tile_scores = jnp.sum(energy * v_ref[...], axis=-1)           # (St, Bt)

    row0 = pl.multiple_of(s_idx * St, 8)
    scores_scr[pl.ds(row0, St), :] = tile_scores

    @pl.when(s_idx == n_s - 1)
    def _finalize():
        scores = scores_scr[...].T                                # (Bt, S_out)
        # masked_fill(mask, -1e6): same finite value PyTorch uses.
        scores = jnp.where(mask_ref[...] != 0, jnp.float32(-1e6), scores)
        # Lane-padding columns (>= real src_len) are pushed far below -1e6 so
        # they contribute exactly 0; fully-masked rows therefore still softmax
        # over the real S columns only, matching the reference.
        col = jax.lax.broadcasted_iota(jnp.int32, scores.shape, 1)
        scores = jnp.where(col >= src_len, jnp.float32(-1e30), scores)

        m = jnp.max(scores, axis=-1, keepdims=True)
        e = jnp.exp(scores - m)
        denom = jnp.sum(e, axis=-1, keepdims=True)
        # pl.reciprocal(denom, approx=True) is a further v5e option (~1e-3 rel err).
        out_ref[...] = (e * pl.reciprocal(denom)).astype(out_ref.dtype)


# ---------------------------------------------------------------------------
# Tiling plan (re-derivable per TPU generation via vmem_budget_bytes)
# ---------------------------------------------------------------------------
def plan_attention(batch, src_len, dec_hid_dim, *,
                   compute_dtype=jnp.float32,
                   block_b=None, block_s=None,
                   vmem_budget_bytes=12 * 1024 * 1024):
    D = dec_hid_dim
    esize = jnp.dtype(compute_dtype).itemsize
    S_out = _round_up(src_len, 128)

    def vmem_need(bt, st):
        return (2 * st * bt * D * esize          # enc_proj block, double-buffered
                + st * bt * D * 4                # f32 energy temporary
                + 4 * bt * S_out * 4             # mask (i32) + out (f32), double-buffered
                + 2 * bt * D * esize             # hidden block
                + S_out * max(bt, 128) * 4       # scores scratch (lane-padded)
                + bt * max(D, 128) * 4           # h_proj scratch
                + 2 * D * D * esize              # Wh
                + (1 << 20))                     # slack (bias/v/compiler temps)

    # Source tile: multiple of 8 sublanes; default is the whole (rounded) source.
    if block_s is not None:
        St = max(8, _round_up(int(block_s), 8))
    else:
        St = _round_up(src_len, 8)

    # Batch tile: multiple of 16 (keeps bf16 sublane packing free), capped so
    # that the batch grid keeps >= 2 steps when possible (v7x: 2 TensorCores).
    if batch > 16:
        cap_b = max(16, _round_up(_cdiv(batch, 2), 16))
    else:
        cap_b = 16
    cap_b = min(cap_b, 256)

    if block_b is not None:
        Bt = max(16, _round_up(int(block_b), 16))
    else:
        Bt = 16
        for cand in range(cap_b, 15, -16):
            if vmem_need(cand, St) <= vmem_budget_bytes:
                Bt = cand
                break
        # If even the smallest batch tile does not fit, tile the source axis.
        while block_s is None and St > 8 and vmem_need(Bt, St) > vmem_budget_bytes:
            St = max(8, _round_up(St // 2, 8))

    n_b = _cdiv(batch, Bt)
    n_s = _cdiv(src_len, St)
    return dict(D=D, Bt=Bt, St=St, n_b=n_b, n_s=n_s,
                B_pad=n_b * Bt, S_pad=n_s * St, S_out=S_out,
                compute_dtype=compute_dtype)


# ---------------------------------------------------------------------------
# Per-sentence precompute (amortized across decoder steps)
# ---------------------------------------------------------------------------
def precompute_encoder_projection(encoder_outputs, W, plan):
    """E_proj = encoder_outputs @ We, computed ONCE per source sentence.

    In NMT decoding this attention runs once per target token over the same
    encoder_outputs, so the only op touching the 2*enc_hid-wide tensor is
    amortized here.  The result is produced directly in compute_dtype,
    time-major (S_pad, B_pad, D), so no extra per-step wrapper pass happens.
    """
    S, B, _ = encoder_outputs.shape
    D = plan["D"]
    cdt = plan["compute_dtype"]
    We = W[:, D:].T.astype(cdt)          # torch cat order: [hidden | encoder]
    proj = jnp.einsum("sbe,ed->sbd",
                      encoder_outputs.astype(cdt), We,
                      preferred_element_type=jnp.float32).astype(cdt)
    pad_s = plan["S_pad"] - S
    pad_b = plan["B_pad"] - B
    if pad_s or pad_b:
        proj = jnp.pad(proj, ((0, pad_s), (0, pad_b), (0, 0)))
    return proj


# ---------------------------------------------------------------------------
# Per-decoder-step attention
# ---------------------------------------------------------------------------
def attention_step(hidden, enc_proj, mask, W, b, v, plan, *,
                   vmem_limit_bytes=32 * 1024 * 1024):
    B, Dh = hidden.shape
    S = mask.shape[1]
    D = plan["D"]
    Bt, St = plan["Bt"], plan["St"]
    n_b, n_s = plan["n_b"], plan["n_s"]
    B_pad, S_pad, S_out = plan["B_pad"], plan["S_pad"], plan["S_out"]
    cdt = plan["compute_dtype"]
    assert enc_proj.shape == (S_pad, B_pad, D), "enc_proj does not match plan"

    Wh = W[:, :D].T.astype(cdt)                      # (Dh, D) acts on hidden
    b2 = b.reshape(1, D).astype(jnp.float32)
    v2 = v.reshape(1, D).astype(jnp.float32)

    hid = hidden.astype(cdt)
    if B_pad != B:
        hid = jnp.pad(hid, ((0, B_pad - B), (0, 0)))
    # Mask padded to the lane-dense width; padded columns are clamped to -1e30
    # inside the kernel so they contribute exactly 0.
    # TODO(synk): optionally replace the (B, S) mask with per-row lengths
    # (scalar-prefetch) and raise enc_proj to pl.Buffered(3) if profiling shows
    # exposed DMA latency.
    msk = jnp.pad(mask.astype(jnp.int32),
                  ((0, B_pad - B), (0, S_out - S)), constant_values=1)

    kernel = functools.partial(_attn_kernel, src_len=S)
    out = pl.pallas_call(
        kernel,
        out_shape=jax.ShapeDtypeStruct((B_pad, S_out), jnp.float32),
        grid=(n_b, n_s),
        in_specs=[
            pl.BlockSpec((Bt, Dh), lambda i, s: (i, 0)),         # hidden
            pl.BlockSpec((St, Bt, D), lambda i, s: (s, i, 0)),   # enc_proj
            pl.BlockSpec((Bt, S_out), lambda i, s: (i, 0)),      # mask (int32)
            pl.BlockSpec((Dh, D), lambda i, s: (0, 0)),          # Wh
            pl.BlockSpec((1, D), lambda i, s: (0, 0)),           # bias
            pl.BlockSpec((1, D), lambda i, s: (0, 0)),           # v
        ],
        out_specs=pl.BlockSpec((Bt, S_out), lambda i, s: (i, 0)),
        scratch_shapes=[
            pltpu.VMEM((Bt, D), jnp.float32),                    # h_proj + bias
            pltpu.VMEM((S_out, Bt), jnp.float32),                # scores accumulator
        ],
        compiler_params=pltpu.CompilerParams(
            dimension_semantics=("parallel", "arbitrary"),
            vmem_limit_bytes=vmem_limit_bytes),
    )(hid, enc_proj, msk, Wh, b2, v2)

    return out[:B, :S]


def attention_forward(hidden, encoder_outputs, mask, W, b, v, *,
                      compute_dtype=jnp.float32, block_b=None, block_s=None,
                      vmem_budget_bytes=12 * 1024 * 1024):
    """Full Attention.forward.  In a real decode loop, call plan_attention /
    precompute_encoder_projection once per source batch and attention_step once
    per target token."""
    B, Dh = hidden.shape
    S = encoder_outputs.shape[0]
    plan = plan_attention(B, S, Dh, compute_dtype=compute_dtype,
                          block_b=block_b, block_s=block_s,
                          vmem_budget_bytes=vmem_budget_bytes)
    enc_proj = precompute_encoder_projection(encoder_outputs, W, plan)
    return attention_step(hidden, enc_proj, mask, W, b, v, plan)


def attention_reference(hidden, encoder_outputs, mask, W, b, v):
    """Pure-JAX reference mirroring the PyTorch forward exactly."""
    S = encoder_outputs.shape[0]
    h_rep = jnp.repeat(hidden[:, None, :], S, axis=1)              # (B, S, D)
    enc = jnp.transpose(encoder_outputs, (1, 0, 2))                # (B, S, 2E)
    cat = jnp.concatenate([h_rep, enc], axis=2)                    # (B, S, D+2E)
    energy = jnp.tanh(cat @ W.T + b)                               # (B, S, D)
    scores = jnp.einsum("d,bsd->bs", v, energy)                    # (B, S)
    scores = jnp.where(mask, -1e6, scores)
    return jax.nn.softmax(scores, axis=1)


if __name__ == "__main__":
    # Small shapes consistent with the module (enc_hid_dim = dec_hid_dim).
    ENC_HID = 32
    DEC_HID = 32
    BATCH = 24        # not a multiple of the batch tile -> exercises batch padding
    SRC_LEN = 20      # not a multiple of 128 -> exercises lane padding of scores/out

    key = jax.random.PRNGKey(0)
    k1, k2, k3, k4, k5 = jax.random.split(key, 5)

    hidden = jax.random.normal(k1, (BATCH, DEC_HID), dtype=jnp.float32)
    encoder_outputs = jax.random.normal(
        k2, (SRC_LEN, BATCH, 2 * ENC_HID), dtype=jnp.float32)

    # Deterministic per-row source lengths; positions >= length are padding.
    lens = 8 + (jnp.arange(BATCH) * 5) % 13                         # in [8, 20]
    mask = jnp.arange(SRC_LEN)[None, :] >= lens[:, None]            # (B, S) bool

    in_dim = 2 * ENC_HID + DEC_HID
    W = jax.random.normal(k3, (DEC_HID, in_dim), dtype=jnp.float32) * 0.1
    b = jax.random.normal(k4, (DEC_HID,), dtype=jnp.float32) * 0.1
    v = jax.random.uniform(k5, (DEC_HID,), dtype=jnp.float32)

    ref = attention_reference(hidden, encoder_outputs, mask, W, b, v)

    # f32 path with auto tiles (single source tile, 2 batch grid steps).
    out_f32 = attention_forward(hidden, encoder_outputs, mask, W, b, v,
                                compute_dtype=jnp.float32)
    out_f32 = jax.block_until_ready(out_f32)
    assert out_f32.shape == (BATCH, SRC_LEN)
    assert jnp.allclose(out_f32, ref, atol=2e-5, rtol=1e-4), "f32 mismatch vs reference"
    assert jnp.allclose(jnp.sum(out_f32, axis=1), 1.0, atol=1e-5)

    # f32 path with forced source tiling (block_s=8 -> 3 S-tiles) to exercise
    # the VMEM-bounded multi-step S axis used at production sizes (v7x).
    out_tiled = attention_forward(hidden, encoder_outputs, mask, W, b, v,
                                  compute_dtype=jnp.float32, block_s=8)
    out_tiled = jax.block_until_ready(out_tiled)
    assert jnp.allclose(out_tiled, ref, atol=2e-5, rtol=1e-4), "S-tiled mismatch vs reference"

    # bf16 matmul-operand / enc_proj-storage path (v6e/v7x MXU + DMA savings);
    # softmax math stays f32, so only a loose check vs the f32 reference.
    out_bf16 = attention_forward(hidden, encoder_outputs, mask, W, b, v,
                                 compute_dtype=jnp.bfloat16)
    out_bf16 = jax.block_until_ready(out_bf16)
    assert out_bf16.shape == (BATCH, SRC_LEN)
    assert jnp.allclose(out_bf16, ref, atol=5e-2), "bf16 mismatch vs reference"
    assert jnp.allclose(jnp.sum(out_bf16, axis=1), 1.0, atol=1e-3)

    print("KERNEL_OK")
</pallas_src>

<mosaic_0001>
module attributes {stable_mosaic.version = 11 : i64} {
  func.func @_attn_kernel(%arg0: i32, %arg1: i32, %arg2: memref<16x32xf32, #tpu.memory_space<vmem>>, %arg3: memref<24x16x32xf32, #tpu.memory_space<vmem>>, %arg4: memref<16x128xi32, #tpu.memory_space<vmem>>, %arg5: memref<32x32xf32, #tpu.memory_space<vmem>>, %arg6: memref<1x32xf32, #tpu.memory_space<vmem>>, %arg7: memref<1x32xf32, #tpu.memory_space<vmem>>, %arg8: memref<16x128xf32, #tpu.memory_space<vmem>>, %arg9: memref<16x32xf32, #tpu.memory_space<vmem>>, %arg10: memref<128x16xf32, #tpu.memory_space<vmem>>) attributes {dimension_semantics = [#tpu.dimension_semantics<parallel>, #tpu.dimension_semantics<arbitrary>], iteration_bounds = array<i64: 2, 1>, scalar_prefetch = 0 : i64, scratch_operands = 2 : i64, tpu.core_type = #tpu.core_type<tc>, window_params = [{transform_indices = @transform_0, window_bounds = array<i64: 16, 32>}, {transform_indices = @transform_1, window_bounds = array<i64: 24, 16, 32>}, {transform_indices = @transform_2, window_bounds = array<i64: 16, 128>}, {pipeline_mode = #tpu.pipeline_mode<synchronous>, transform_indices = @transform_3, window_bounds = array<i64: 32, 32>}, {pipeline_mode = #tpu.pipeline_mode<synchronous>, transform_indices = @transform_4, window_bounds = array<i64: 1, 32>}, {pipeline_mode = #tpu.pipeline_mode<synchronous>, transform_indices = @transform_5, window_bounds = array<i64: 1, 32>}, {transform_indices = @transform_6, window_bounds = array<i64: 16, 128>}]} {
    %c0_i32 = arith.constant 0 : i32
    %0 = arith.cmpi eq, %arg1, %c0_i32 : i32
    %1 = arith.extui %0 : i1 to i32
    %c0_i32_0 = arith.constant 0 : i32
    %2 = arith.cmpi ne, %1, %c0_i32_0 : i32
    scf.if %2 {
      %c0_10 = arith.constant 0 : index
      %c0_11 = arith.constant 0 : index
      %21 = vector.load %arg2[%c0_10, %c0_11] : memref<16x32xf32, #tpu.memory_space<vmem>>, vector<16x32xf32>
      %c0_12 = arith.constant 0 : index
      %c0_13 = arith.constant 0 : index
      %22 = vector.load %arg5[%c0_12, %c0_13] : memref<32x32xf32, #tpu.memory_space<vmem>>, vector<32x32xf32>
      %cst_14 = arith.constant dense<0.000000e+00> : vector<16x32xf32>
      %23 = tpu.matmul %21, %22, %cst_14 {dimension_numbers = #tpu.dot_dimension_numbers<[1], [0], [0], [1], [0, 0, 1, 1], [], []>} : vector<16x32xf32>, vector<32x32xf32>, vector<16x32xf32> -> vector<16x32xf32>
      %c0_15 = arith.constant 0 : index
      %c0_16 = arith.constant 0 : index
      %24 = vector.load %arg6[%c0_15, %c0_16] : memref<1x32xf32, #tpu.memory_space<vmem>>, vector<1x32xf32>
      %25 = vector.broadcast %24 : vector<1x32xf32> to vector<16x32xf32>
      %26 = arith.addf %23, %25 : vector<16x32xf32>
      %c0_17 = arith.constant 0 : index
      %c0_18 = arith.constant 0 : index
      %27 = vector.load %arg9[%c0_17, %c0_18] : memref<16x32xf32, #tpu.memory_space<vmem>>, vector<16x32xf32>
      tpu.vector_store %arg9[%c0_17, %c0_18], %26 {strides = array<i32>} : memref<16x32xf32, #tpu.memory_space<vmem>>, vector<16x32xf32>,
      %cst_19 = arith.constant -1.000000e+30 : f32
      %28 = vector.broadcast %cst_19 : f32 to vector<128x16xf32>
      %c0_20 = arith.constant 0 : index
      %c0_21 = arith.constant 0 : index
      %29 = vector.load %arg10[%c0_20, %c0_21] : memref<128x16xf32, #tpu.memory_space<vmem>>, vector<128x16xf32>
      tpu.vector_store %arg10[%c0_20, %c0_21], %28 {strides = array<i32>} : memref<128x16xf32, #tpu.memory_space<vmem>>, vector<128x16xf32>,
    } else {
    }
    %c0 = arith.constant 0 : index
    %c0_1 = arith.constant 0 : index
    %c0_2 = arith.constant 0 : index
    %3 = vector.load %arg3[%c0, %c0_1, %c0_2] : memref<24x16x32xf32, #tpu.memory_space<vmem>>, vector<24x16x32xf32>
    %c0_3 = arith.constant 0 : index
    %c0_4 = arith.constant 0 : index
    %4 = vector.load %arg9[%c0_3, %c0_4] : memref<16x32xf32, #tpu.memory_space<vmem>>, vector<16x32xf32>
    %5 = vector.shape_cast %4 : vector<16x32xf32> to vector<1x16x32xf32>
    %6 = vector.broadcast %5 : vector<1x16x32xf32> to vector<24x16x32xf32>
    %7 = arith.addf %3, %6 : vector<24x16x32xf32>
    %8 = math.tanh %7 : vector<24x16x32xf32>
    %c0_5 = arith.constant 0 : index
    %c0_6 = arith.constant 0 : index
    %9 = vector.load %arg7[%c0_5, %c0_6] : memref<1x32xf32, #tpu.memory_space<vmem>>, vector<1x32xf32>
    %10 = vector.shape_cast %9 : vector<1x32xf32> to vector<1x1x32xf32>
    %11 = vector.broadcast %10 : vector<1x1x32xf32> to vector<24x16x32xf32>
    %12 = arith.mulf %8, %11 : vector<24x16x32xf32>
    %cst = arith.constant dense<0.000000e+00> : vector<24x16xf32>
    %13 = vector.multi_reduction <add>, %12, %cst [2] : vector<24x16x32xf32> to vector<24x16xf32>
    %c24_i32 = arith.constant 24 : i32
    %14 = arith.muli %arg1, %c24_i32 : i32
    %15 = tpu.assume_multiple %14, 8 : i32
    %16 = arith.index_cast %15 : i32 to index
    %c0_7 = arith.constant 0 : index
    %17 = vector.load %arg10[%16, %c0_7] : memref<128x16xf32, #tpu.memory_space<vmem>>, vector<24x16xf32>
    tpu.vector_store %arg10[%16, %c0_7], %13 {strides = array<i32>} : memref<128x16xf32, #tpu.memory_space<vmem>>, vector<24x16xf32>,
    %c0_i32_8 = arith.constant 0 : i32
    %18 = arith.cmpi eq, %arg1, %c0_i32_8 : i32
    %19 = arith.extui %18 : i1 to i32
    %c0_i32_9 = arith.constant 0 : i32
    %20 = arith.cmpi ne, %19, %c0_i32_9 : i32
    scf.if %20 {
      %c0_10 = arith.constant 0 : index
      %c0_11 = arith.constant 0 : index
      %21 = vector.load %arg10[%c0_10, %c0_11] : memref<128x16xf32, #tpu.memory_space<vmem>>, vector<128x16xf32>
      %22 = tpu.transpose %21, [1, 0] : vector<128x16xf32> -> vector<16x128xf32>
      %c0_12 = arith.constant 0 : index
      %c0_13 = arith.constant 0 : index
      %23 = vector.load %arg4[%c0_12, %c0_13] : memref<16x128xi32, #tpu.memory_space<vmem>>, vector<16x128xi32>
      %c0_i32_14 = arith.constant 0 : i32
      %24 = vector.broadcast %c0_i32_14 : i32 to vector<16x128xi32>
      %25 = arith.cmpi ne, %23, %24 : vector<16x128xi32>
      %cst_15 = arith.constant -1.000000e+06 : f32
      %26 = vector.broadcast %cst_15 : f32 to vector<16x128xf32>
      %27 = arith.select %25, %26, %22 : vector<16x128xi1>, vector<16x128xf32>
      %28 = tpu.iota {dimensions = array<i32: 1>} : vector<16x128xi32>
      %c20_i32 = arith.constant 20 : i32
      %29 = vector.broadcast %c20_i32 : i32 to vector<16x128xi32>
      %30 = arith.cmpi sge, %28, %29 : vector<16x128xi32>
      %cst_16 = arith.constant -1.000000e+30 : f32
      %31 = vector.broadcast %cst_16 : f32 to vector<16x128xf32>
      %32 = arith.select %30, %31, %27 : vector<16x128xi1>, vector<16x128xf32>
      %cst_17 = arith.constant dense<0xFF800000> : vector<16xf32>
      %33 = vector.multi_reduction <maximumf>, %32, %cst_17 [1] : vector<16x128xf32> to vector<16xf32>
      %34 = vector.shape_cast %33 : vector<16xf32> to vector<16x1xf32>
      %35 = vector.broadcast %34 : vector<16x1xf32> to vector<16x128xf32>
      %36 = arith.subf %32, %35 : vector<16x128xf32>
      %37 = math.exp %36 : vector<16x128xf32>
      %cst_18 = arith.constant dense<0.000000e+00> : vector<16xf32>
      %38 = vector.multi_reduction <add>, %37, %cst_18 [1] : vector<16x128xf32> to vector<16xf32>
      %39 = vector.shape_cast %38 : vector<16xf32> to vector<16x1xf32>
      %40 = tpu.reciprocal %39 : vector<16x1xf32> -> vector<16x1xf32>
      %41 = vector.broadcast %40 : vector<16x1xf32> to vector<16x128xf32>
      %42 = arith.mulf %37, %41 : vector<16x128xf32>
      %c0_19 = arith.constant 0 : index
      %c0_20 = arith.constant 0 : index
      %43 = vector.load %arg8[%c0_19, %c0_20] : memref<16x128xf32, #tpu.memory_space<vmem>>, vector<16x128xf32>
      tpu.vector_store %arg8[%c0_19, %c0_20], %42 {strides = array<i32>} : memref<16x128xf32, #tpu.memory_space<vmem>>, vector<16x128xf32>,
    } else {
    }
    return
  }
  func.func @transform_0(%arg0: i32, %arg1: i32) -> (i32, i32) {
    %c0_i32 = arith.constant 0 : i32
    %c0_i32_0 = arith.constant 0 : i32
    return %arg0, %c0_i32 : i32, i32
  }
  func.func @transform_1(%arg0: i32, %arg1: i32) -> (i32, i32, i32) {
    %c0_i32 = arith.constant 0 : i32
    %c0_i32_0 = arith.constant 0 : i32
    return %arg1, %arg0, %c0_i32 : i32, i32, i32
  }
  func.func @transform_2(%arg0: i32, %arg1: i32) -> (i32, i32) {
    %c0_i32 = arith.constant 0 : i32
    %c0_i32_0 = arith.constant 0 : i32
    return %arg0, %c0_i32 : i32, i32
  }
  func.func @transform_3(%arg0: i32, %arg1: i32) -> (i32, i32) {
    %c0_i32 = arith.constant 0 : i32
    %c0_i32_0 = arith.constant 0 : i32
    %c0_i32_1 = arith.constant 0 : i32
    return %c0_i32, %c0_i32_0 : i32, i32
  }
  func.func @transform_4(%arg0: i32, %arg1: i32) -> (i32, i32) {
    %c0_i32 = arith.constant 0 : i32
    %c0_i32_0 = arith.constant 0 : i32
    %c0_i32_1 = arith.constant 0 : i32
    return %c0_i32, %c0_i32_0 : i32, i32
  }
  func.func @transform_5(%arg0: i32, %arg1: i32) -> (i32, i32) {
    %c0_i32 = arith.constant 0 : i32
    %c0_i32_0 = arith.constant 0 : i32
    %c0_i32_1 = arith.constant 0 : i32
    return %c0_i32, %c0_i32_0 : i32, i32
  }
  func.func @transform_6(%arg0: i32, %arg1: i32) -> (i32, i32) {
    %c0_i32 = arith.constant 0 : i32
    %c0_i32_0 = arith.constant 0 : i32
    return %arg0, %c0_i32 : i32, i32
  }
}

</mosaic_0001>

<llo_original>
// kernel: tpu_custom_call.1
$region0: #{tpu_custom_call.1}
  #allocation0 [shape = 'u32[]', space=smem, size = 0x4, offset = 0x4, fixed_abs, tag = 'smem constant byte address 0x4 - core index']
  #allocation1 [shape = 'u32[72,128]{1,0:T(1,128)}', space=vmem, size = 0x9000, scoped, tag = 'internal scratch']
  #allocation2 [shape = 'f32[16,32]{1,0:T(8,128)}', space=vmem, size = 0x2000, scoped, tag = 'scratch operand']
  #allocation3 [shape = 'f32[128,16]{1,0:T(8,128)}', space=vmem, size = 0x10000, scoped, tag = 'scratch operand']
  #allocation13 [shape = 's32[]', space=sflag, size = 0x4, offset = 0, fixed_abs, tag = 'sflag constant byte address 0x0 - dummy sync flag']
  %s0 = inlined_call_operand.hbm [shape: f32[32,32], index: 0, kind: input, shape index: {}]
  %s1 = inlined_call_operand.hbm [shape: f32[24,32,32], index: 1, kind: input, shape index: {}]
  %s2 = inlined_call_operand.hbm [shape: s32[32,128], index: 2, kind: input, shape index: {}]
  %s3 = inlined_call_operand.hbm [shape: f32[32,32], index: 3, kind: input, shape index: {}]
  %s4 = inlined_call_operand.vmem [shape: f32[1,32], index: 4, kind: input, shape index: {}]
  %s5 = inlined_call_operand.vmem [shape: f32[1,32], index: 5, kind: input, shape index: {}]
  %s6 = inlined_call_operand.hbm [shape: f32[32,128], index: 6, kind: output, shape index: {}]
  %s7 = sld [smem:[#allocation0]]
  $region81: #{tpu_custom_call.1} parent=0
    _
  %s9 = ssub.s32 1, %s7
  %s10 = scalar_select 0, %s9, %s7
  $region1: #{tpu_custom_call.1} parent=0
    #allocation4 [shape = 'u8[16384]{0}', space=vmem, size = 0x4000, scoped, tag = 'input window, operand 0']
    #allocation5 [shape = 's32[2]{0}', space=sflag, size = 0x8, scoped, tag = 'scoped memory for tpu_custom_call.1']
    #allocation6 [shape = 's32[2]{0}', space=sflag, size = 0x8, scoped, tag = 'scoped memory for tpu_custom_call.1']
    #allocation7 [shape = 'u8[393216]{0}', space=vmem, size = 0x60000, scoped, tag = 'input window, operand 1']
    #allocation8 [shape = 's32[2]{0}', space=sflag, size = 0x8, scoped, tag = 'scoped memory for tpu_custom_call.1']
    #allocation9 [shape = 'u8[16384]{0}', space=vmem, size = 0x4000, scoped, tag = 'input window, operand 2']
    #allocation10 [shape = 'u8[16384]{0}', space=vmem, size = 0x4000, scoped, tag = 'input window, operand 3, single buffered']
    #allocation11 [shape = 's32[1]{0}', space=sflag, size = 0x4, scoped, tag = 'scoped memory for tpu_custom_call.1']
    #allocation12 [shape = 'u8[16384]{0}', space=vmem, size = 0x4000, scoped, tag = 'output window, operand 0']
    %11 = vsyncpa [#allocation5], 0
    %s12 = scalar_lea.sflag [#allocation5], 1
    %13 = vsyncpa %s12, 0
    %14 = vsyncpa [#allocation8], 0
    %s15 = scalar_lea.sflag [#allocation8], 1
    %16 = vsyncpa %s15, 0
    %17 = vsyncpa [#allocation11], 0
    %18 = vsyncpa [#allocation6], 0
    %s19 = scalar_lea.sflag [#allocation6], 1
    %20 = vsyncpa %s19, 0
    loop: start=0, step=1, limit=4
    $region2: #{tpu_custom_call.1} parent=1 // loop_pre_header
      _
    $region3: #{tpu_custom_call.1} parent=1 // loop_header
      %s22 = sphi 0, %s26
      %p23 = scmp.ge.s32.totalorder %s22, 4
      %s29 = sphi 0, %s41
      %s30 = sphi 0, %s37
      %s31 = sphi 0, %s29
      %s32 = sphi 0, %s30
      %s33 = sphi 0, %s31
      %s34 = sphi 0, %s32
      %s44 = sphi 0, %s46
      %s47 = sphi 0, %s44
      %s48 = sphi 0, %s47
      %s64 = sphi 0, %s48
      %s72 = sphi 0, %s74
      %s75 = sphi 0, %s72
      %s76 = sphi 0, %s75
      %s92 = sphi 0, %s76
      %s98 = sphi 0, %s100
      %s101 = sphi 0, %s98
      %s102 = sphi 0, %s101
      %s118 = sphi 0, %s102
      %s122 = sphi 0, %s122
      %s124 = sphi 0, %s122
      %s125 = sphi 0, %s124
      %s139 = sphi 0, %s125
      %s143 = sphi 0, %s143
      %s145 = sphi 0, %s143
      %s146 = sphi 0, %s145
      %s160 = sphi 0, %s146
      %s164 = sphi 0, %s164
      %s166 = sphi 0, %s164
      %s167 = sphi 0, %s166
      %s181 = sphi 0, %s167
      %s187 = sphi 0, %s189
      %s190 = sphi 0, %s187
      %s191 = sphi 0, %s190
      %s207 = sphi 0, %s191
    $region4: #{tpu_custom_call.1} parent=1 // loop_header_branch
      %25 = sbr.rel (%p23) target = $region8
    $region5: #{tpu_custom_call.1} parent=1 // loop_body
      %s27 = ssub.s32 %s22, 1
      %s28 = ssub.s32 %s22, 2
      %s35 = sadd.s32 1, %s30
      %p36 = scmp.ge.s32.totalorder %s35, 1
      %s37 = scalar_select %p36, 0, %s35
      %s38 = sadd.s32 1, %s29
      %s39 = scalar_select %p36, %s38, %s29
      %p40 = scmp.ge.s32.totalorder %s39, 2
      %s41 = scalar_select %p40, 0, %s39
      %s42 = ssub.s32 %s29, %s41
      %p43 = scmp.eq.s32.totalorder %s42, 0
      %s45 = sadd.s32 %s44, 1
      %s46 = scalar_select %p43, %s44, %s45
      %p49 = pneg %p43
      %p50 = scmp.eq.s32.totalorder %s22, 1
      %p51 = por %p49, %p50
      %p52 = scmp.ne.s32.totalorder %s44, %s47
      %p53 = scmp.eq.s32.totalorder %s22, 0
      %p54 = por %p52, %p53
      %p55 = scmp.ne.s32.totalorder %s44, %s47
      %p56 = scmp.eq.s32.totalorder %s27, 1
      %p57 = por %p55, %p56
      %p58 = scmp.ne.s32.totalorder %s47, %s48
      %p59 = scmp.eq.s32.totalorder %s27, 0
      %p60 = por %p58, %p59
      %p61 = scmp.ne.s32.totalorder %s47, %s48
      %p62 = scmp.eq.s32.totalorder %s28, 1
      %p63 = por %p61, %p62
      %p65 = scmp.ne.s32.totalorder %s48, %s64
      %p66 = scmp.eq.s32.totalorder %s28, 0
      %p67 = por %p65, %p66
      %s68 = ssub.s32 %s30, %s37
      %s69 = ssub.s32 %s29, %s41
      %s70 = sor.u32 %s68, %s69
      %p71 = scmp.eq.s32.totalorder %s70, 0
      %s73 = sadd.s32 %s72, 1
      %s74 = scalar_select %p71, %s72, %s73
      %p77 = pneg %p71
      %p78 = scmp.eq.s32.totalorder %s22, 1
      %p79 = por %p77, %p78
      %p80 = scmp.ne.s32.totalorder %s72, %s75
      %p81 = scmp.eq.s32.totalorder %s22, 0
      %p82 = por %p80, %p81
      %p83 = scmp.ne.s32.totalorder %s72, %s75
      %p84 = scmp.eq.s32.totalorder %s27, 1
      %p85 = por %p83, %p84
      %p86 = scmp.ne.s32.totalorder %s75, %s76
      %p87 = scmp.eq.s32.totalorder %s27, 0
      %p88 = por %p86, %p87
      %p89 = scmp.ne.s32.totalorder %s75, %s76
      %p90 = scmp.eq.s32.totalorder %s28, 1
      %p91 = por %p89, %p90
      %p93 = scmp.ne.s32.totalorder %s76, %s92
      %p94 = scmp.eq.s32.totalorder %s28, 0
      %p95 = por %p93, %p94
      %s96 = ssub.s32 %s29, %s41
      %p97 = scmp.eq.s32.totalorder %s96, 0
      %s99 = sadd.s32 %s98, 1
      %s100 = scalar_select %p97, %s98, %s99
      %p103 = pneg %p97
      %p104 = scmp.eq.s32.totalorder %s22, 1
      %p105 = por %p103, %p104
      %p106 = scmp.ne.s32.totalorder %s98, %s101
      %p107 = scmp.eq.s32.totalorder %s22, 0
      %p108 = por %p106, %p107
      %p109 = scmp.ne.s32.totalorder %s98, %s101
      %p110 = scmp.eq.s32.totalorder %s27, 1
      %p111 = por %p109, %p110
      %p112 = scmp.ne.s32.totalorder %s101, %s102
      %p113 = scmp.eq.s32.totalorder %s27, 0
      %p114 = por %p112, %p113
      %p115 = scmp.ne.s32.totalorder %s101, %s102
      %p116 = scmp.eq.s32.totalorder %s28, 1
      %p117 = por %p115, %p116
      %p119 = scmp.ne.s32.totalorder %s102, %s118
      %p120 = scmp.eq.s32.totalorder %s28, 0
      %p121 = por %p119, %p120
      %s123 = sadd.s32 %s122, 1
      %p126 = scmp.eq.s32.totalorder %s22, 1
      %p127 = scmp.ne.s32.totalorder %s122, %s124
      %p128 = scmp.eq.s32.totalorder %s22, 0
      %p129 = por %p127, %p128
      %p130 = scmp.ne.s32.totalorder %s122, %s124
      %p131 = scmp.eq.s32.totalorder %s27, 1
      %p132 = por %p130, %p131
      %p133 = scmp.ne.s32.totalorder %s124, %s125
      %p134 = scmp.eq.s32.totalorder %s27, 0
      %p135 = por %p133, %p134
      %p136 = scmp.ne.s32.totalorder %s124, %s125
      %p137 = scmp.eq.s32.totalorder %s28, 1
      %p138 = por %p136, %p137
      %p140 = scmp.ne.s32.totalorder %s125, %s139
      %p141 = scmp.eq.s32.totalorder %s28, 0
      %p142 = por %p140, %p141
      %s144 = sadd.s32 %s143, 1
      %p147 = scmp.eq.s32.totalorder %s22, 1
      %p148 = scmp.ne.s32.totalorder %s143, %s145
      %p149 = scmp.eq.s32.totalorder %s22, 0
      %p150 = por %p148, %p149
      %p151 = scmp.ne.s32.totalorder %s143, %s145
      %p152 = scmp.eq.s32.totalorder %s27, 1
      %p153 = por %p151, %p152
      %p154 = scmp.ne.s32.totalorder %s145, %s146
      %p155 = scmp.eq.s32.totalorder %s27, 0
      %p156 = por %p154, %p155
      %p157 = scmp.ne.s32.totalorder %s145, %s146
      %p158 = scmp.eq.s32.totalorder %s28, 1
      %p159 = por %p157, %p158
      %p161 = scmp.ne.s32.totalorder %s146, %s160
      %p162 = scmp.eq.s32.totalorder %s28, 0
      %p163 = por %p161, %p162
      %s165 = sadd.s32 %s164, 1
      %p168 = scmp.eq.s32.totalorder %s22, 1
      %p169 = scmp.ne.s32.totalorder %s164, %s166
      %p170 = scmp.eq.s32.totalorder %s22, 0
      %p171 = por %p169, %p170
      %p172 = scmp.ne.s32.totalorder %s164, %s166
      %p173 = scmp.eq.s32.totalorder %s27, 1
      %p174 = por %p172, %p173
      %p175 = scmp.ne.s32.totalorder %s166, %s167
      %p176 = scmp.eq.s32.totalorder %s27, 0
      %p177 = por %p175, %p176
      %p178 = scmp.ne.s32.totalorder %s166, %s167
      %p179 = scmp.eq.s32.totalorder %s28, 1
      %p180 = por %p178, %p179
      %p182 = scmp.ne.s32.totalorder %s167, %s181
      %p183 = scmp.eq.s32.totalorder %s28, 0
      %p184 = por %p182, %p183
      %s185 = ssub.s32 %s29, %s41
      %p186 = scmp.eq.s32.totalorder %s185, 0
      %s188 = sadd.s32 %s187, 1
      %s189 = scalar_select %p186, %s187, %s188
      %p192 = pneg %p186
      %p193 = scmp.eq.s32.totalorder %s22, 1
      %p194 = por %p192, %p193
      %p195 = scmp.ne.s32.totalorder %s187, %s190
      %p196 = scmp.eq.s32.totalorder %s22, 0
      %p197 = por %p195, %p196
      %p198 = scmp.ne.s32.totalorder %s187, %s190
      %p199 = scmp.eq.s32.totalorder %s27, 1
      %p200 = por %p198, %p199
      %p201 = scmp.ne.s32.totalorder %s190, %s191
      %p202 = scmp.eq.s32.totalorder %s27, 0
      %p203 = por %p201, %p202
      %p204 = scmp.ne.s32.totalorder %s190, %s191
      %p205 = scmp.eq.s32.totalorder %s28, 1
      %p206 = por %p204, %p205
      %p208 = scmp.ne.s32.totalorder %s191, %s207
      %p209 = scmp.eq.s32.totalorder %s28, 0
      %p210 = por %p208, %p209
      %p211 = scmp.le.s32.totalorder 1, %s22
      %p212 = scmp.lt.s32.totalorder %s22, 3
      %p213 = pnand %p211, %p212
      %p214 = pneg %p213
      // Predicated region
      $region9: #{tpu_custom_call.1} parent=5 // pred_check
        _
      $region10: #{tpu_custom_call.1} parent=5 // pred_check_branch
        %216 = sbr.rel (%p213) target = $region12
      $region11: #{tpu_custom_call.1} parent=5 // pred_region
        %s217 = ssub.s32 %s22, 1
        // Predicated region
        $region13: #{tpu_custom_call.1} parent=11 // pred_check
          %p218 = pneg %p135
        $region14: #{tpu_custom_call.1} parent=11 // pred_check_branch
          %220 = sbr.rel (%p218) target = $region16
        $region15: #{tpu_custom_call.1} parent=11 // pred_region
          %222 = vsyncadd [#allocation11], 0
          %s223 = sshll.u32 %s3, 4
          %s224 = int_to_ptr.hbm [resolvable:$true] %s223
          %s225 = sshll.u32 [#allocation10], 4
          %s226 = int_to_ptr.vmem [resolvable:$true] %s225
          %231 = dma.hbm_to_vmem [thread:$0]  %s224, 512, %s226, [#allocation11], 128, 128, 8
        $region16: #{tpu_custom_call.1} parent=11 // pred_fallthru
          _
        // Predicated region
        $region17: #{tpu_custom_call.1} parent=11 // pred_check
          %p232 = pneg %p156
        $region18: #{tpu_custom_call.1} parent=11 // pred_check_branch
          %234 = sbr.rel (%p232) target = $region20
        $region19: #{tpu_custom_call.1} parent=11 // pred_region
          _
        $region20: #{tpu_custom_call.1} parent=11 // pred_fallthru
          _
        // Predicated region
        $region21: #{tpu_custom_call.1} parent=11 // pred_check
          %p235 = pneg %p177
        $region22: #{tpu_custom_call.1} parent=11 // pred_check_branch
          %237 = sbr.rel (%p235) target = $region24
        $region23: #{tpu_custom_call.1} parent=11 // pred_region
          _
        $region24: #{tpu_custom_call.1} parent=11 // pred_fallthru
          _
      $region12: #{tpu_custom_call.1} parent=5 // pred_fallthru
        _
      %p238 = scmp.lt.s32.totalorder %s22, 2
      // Predicated region
      $region25: #{tpu_custom_call.1} parent=5 // pred_check
        %p239 = pneg %p238
      $region26: #{tpu_custom_call.1} parent=5 // pred_check_branch
        %241 = sbr.rel (%p239) target = $region28
      $region27: #{tpu_custom_call.1} parent=5 // pred_region
        // Predicated region
        $region29: #{tpu_custom_call.1} parent=27 // pred_check
          %p242 = pneg %p54
        $region30: #{tpu_custom_call.1} parent=27 // pred_check_branch
          %244 = sbr.rel (%p242) target = $region32
        $region31: #{tpu_custom_call.1} parent=27 // pred_region
          %s245 = sand.u32 %s44, 1
          %s246 = scalar_lea.sflag [#allocation5], %s245
          %s247 = sand.u32 %s44, 1
          %s248 = smul.addr %s247, 16
          %s249 = scalar_lea.vmem [#allocation4], %s248
          %s250 = smul.u32 2, %s29
          %252 = vsyncadd %s246, 0
          %s253 = smul.addr %s250, 8
          %s254 = scalar_lea.hbm %s0, %s253
          %s255 = sshll.u32 %s254, 4
          %s256 = int_to_ptr.hbm [resolvable:$true] %s255
          %s257 = sshll.u32 %s249, 4
          %s258 = int_to_ptr.vmem [resolvable:$true] %s257
          %263 = dma.hbm_to_vmem [thread:$0]  %s256, 256, %s258, %s246, 128, 128, 8
        $region32: #{tpu_custom_call.1} parent=27 // pred_fallthru
          _
        // Predicated region
        $region33: #{tpu_custom_call.1} parent=27 // pred_check
          %p264 = pneg %p82
        $region34: #{tpu_custom_call.1} parent=27 // pred_check_branch
          %266 = sbr.rel (%p264) target = $region36
        $region35: #{tpu_custom_call.1} parent=27 // pred_region
          #allocation14 [shape = 'u32[6]{0}', space=smem, size = 0x18, scoped, tag = 'DMA stride descriptor']
          %s267 = sand.u32 %s22, 1
          %s268 = scalar_lea.sflag [#allocation8], %s267
          %s269 = sand.u32 %s72, 1
          %s270 = smul.addr %s269, 384
          %s271 = scalar_lea.vmem [#allocation7], %s270
          %s272 = smul.u32 24, %s30
          %s273 = smul.u32 2, %s29
          %275 = vsyncadd %s268, 0
          %s276 = smul.addr %s272, 4
          %s277 = sadd.s32 %s273, %s276
          %s278 = smul.addr %s277, 8
          %s279 = scalar_lea.hbm %s1, %s278
          %s281 = sshll.u32 1, 14
          %s282 = sxor.u32 4294967295, %s281
          %s284 = sld [smem:[#allocation0]]
          %s285 = sadd.s32 2, %s284
          %s287 = sshll.u32 7, 26
          %s288 = sxor.u32 4294967295, %s287
          %s289 = sand.u32 0, %s288
          %s290 = sshll.u32 %s285, 26
          %s291 = sor.u32 %s289, %s290
          %s292 = sshll.u32 %s279, 4
          %s293 = int_to_ptr.hbm [resolvable:$true] %s292
          %s294 = sshll.u32 %s271, 4
          %s295 = int_to_ptr.vmem [resolvable:$true] %s294
          %301 = sst [smem:[#allocation14]] 512
          %s302 = scalar_lea.smem [#allocation14], 1
          %303 = sst [smem:[%s302]] 256
          %s304 = scalar_lea.smem [#allocation14], 2
          %305 = sst [smem:[%s304]] 2
          %s306 = scalar_lea.smem [#allocation14], 3
          %307 = sst [smem:[%s306]] 128
          %s308 = scalar_lea.smem [#allocation14], 4
          %309 = sst [smem:[%s308]] 128
          %s310 = scalar_lea.smem [#allocation14], 5
          %311 = sst [smem:[%s310]] 8
          %313 = dma.general %s293, 6144, %s295, %s268, [#allocation13], [#allocation14], %s291, 0
        $region36: #{tpu_custom_call.1} parent=27 // pred_fallthru
          _
        // Predicated region
        $region37: #{tpu_custom_call.1} parent=27 // pred_check
          %p314 = pneg %p108
        $region38: #{tpu_custom_call.1} parent=27 // pred_check_branch
          %316 = sbr.rel (%p314) target = $region40
        $region39: #{tpu_custom_call.1} parent=27 // pred_region
          %s317 = sand.u32 %s22, 1
          %s318 = scalar_lea.sflag [#allocation8], %s317
          %s319 = sand.u32 %s98, 1
          %s320 = smul.addr %s319, 16
          %s321 = scalar_lea.vmem [#allocation9], %s320
          %s322 = smul.u32 2, %s29
          %324 = vsyncadd %s318, 0
          %s325 = smul.addr %s322, 8
          %s326 = scalar_lea.hbm %s2, %s325
          %s327 = sshll.u32 %s326, 4
          %s328 = int_to_ptr.hbm [resolvable:$true] %s327
          %s329 = sshll.u32 %s321, 4
          %s330 = int_to_ptr.vmem [resolvable:$true] %s329
          %335 = dma.hbm_to_vmem [thread:$0]  %s328, 256, %s330, %s318, 128, 128, 8
        $region40: #{tpu_custom_call.1} parent=27 // pred_fallthru
          _
      $region28: #{tpu_custom_call.1} parent=5 // pred_fallthru
        _
      %p336 = scmp.le.s32.totalorder 1, %s22
      %p337 = scmp.lt.s32.totalorder %s22, 3
      %p338 = pnand %p336, %p337
      %p339 = pneg %p338
      // Predicated region
      $region41: #{tpu_custom_call.1} parent=5 // pred_check
        _
      $region42: #{tpu_custom_call.1} parent=5 // pred_check_branch
        %341 = sbr.rel (%p338) target = $region44
      $region43: #{tpu_custom_call.1} parent=5 // pred_region
        %s342 = ssub.s32 %s22, 1
        %s343 = sand.u32 %s47, 1
        %s344 = scalar_lea.sflag [#allocation5], %s343
        %s345 = sand.u32 %s47, 1
        %s346 = smul.addr %s345, 16
        %s347 = scalar_lea.vmem [#allocation4], %s346
        // Predicated region
        $region45: #{tpu_custom_call.1} parent=43 // pred_check
          %p348 = pneg %p60
        $region46: #{tpu_custom_call.1} parent=43 // pred_check_branch
          %350 = sbr.rel (%p348) target = $region48
        $region47: #{tpu_custom_call.1} parent=43 // pred_region
          %352 = dma.done %s344, 256
        $region48: #{tpu_custom_call.1} parent=43 // pred_fallthru
          _
        %s353 = sand.u32 %s27, 1
        %s354 = scalar_lea.sflag [#allocation8], %s353
        %s355 = sand.u32 %s75, 1
        %s356 = smul.addr %s355, 384
        %s357 = scalar_lea.vmem [#allocation7], %s356
        // Predicated region
        $region49: #{tpu_custom_call.1} parent=43 // pred_check
          %p358 = pneg %p88
        $region50: #{tpu_custom_call.1} parent=43 // pred_check_branch
          %360 = sbr.rel (%p358) target = $region52
        $region51: #{tpu_custom_call.1} parent=43 // pred_region
          %362 = dma.done %s354, 6144
        $region52: #{tpu_custom_call.1} parent=43 // pred_fallthru
          _
        %s363 = sand.u32 %s27, 1
        %s364 = scalar_lea.sflag [#allocation8], %s363
        %s365 = sand.u32 %s101, 1
        %s366 = smul.addr %s365, 16
        %s367 = scalar_lea.vmem [#allocation9], %s366
        // Predicated region
        $region53: #{tpu_custom_call.1} parent=43 // pred_check
          %p368 = pneg %p114
        $region54: #{tpu_custom_call.1} parent=43 // pred_check_branch
          %370 = sbr.rel (%p368) target = $region56
        $region55: #{tpu_custom_call.1} parent=43 // pred_region
          %372 = dma.done %s364, 256
        $region56: #{tpu_custom_call.1} parent=43 // pred_fallthru
          _
        // Predicated region
        $region57: #{tpu_custom_call.1} parent=43 // pred_check
          %p373 = pneg %p135
        $region58: #{tpu_custom_call.1} parent=43 // pred_check_branch
          %375 = sbr.rel (%p373) target = $region60
        $region59: #{tpu_custom_call.1} parent=43 // pred_region
          %377 = dma.done [#allocation11], 512
        $region60: #{tpu_custom_call.1} parent=43 // pred_fallthru
          _
        %s378 = sand.u32 %s47, 1
        %s379 = scalar_lea.sflag [#allocation5], %s378
        %s380 = sand.u32 %s47, 1
        %s381 = smul.addr %s380, 16
        %s382 = scalar_lea.vmem [#allocation4], %s381
        %p383 = pneg %p60
        %p384 = pneg %p57
        %s385 = sand.u32 %s27, 1
        %s386 = scalar_lea.sflag [#allocation8], %s385
        %s387 = sand.u32 %s75, 1
        %s388 = smul.addr %s387, 384
        %s389 = scalar_lea.vmem [#allocation7], %s388
        %p390 = pneg %p88
        %p391 = pneg %p85
        %s392 = sand.u32 %s27, 1
        %s393 = scalar_lea.sflag [#allocation8], %s392
        %s394 = sand.u32 %s101, 1
        %s395 = smul.addr %s394, 16
        %s396 = scalar_lea.vmem [#allocation9], %s395
        %p397 = pneg %p114
        %p398 = pneg %p111
        %p399 = pneg %p135
        %p400 = pneg %p132
        %p401 = pneg %p156
        %p402 = pneg %p153
        %p403 = pneg %p177
        %p404 = pneg %p174
        %p405 = pneg %p203
        %p406 = pneg %p200
        %s407 = sand.u32 %s190, 1
        %s408 = scalar_lea.sflag [#allocation6], %s407
        %s409 = sand.u32 %s190, 1
        %s410 = smul.addr %s409, 16
        %s411 = scalar_lea.vmem [#allocation12], %s410
        %s412 = smul.u32 2, %s31
        %s413 = smul.u32 24, %s32
        %s414 = smul.u32 2, %s31
        %s415 = smul.u32 2, %s31
        %s416 = smul.u32 2, %s31
        %p417 = scmp.eq.s32.totalorder %s32, 0
        // Predicated region
        $region61: #{tpu_custom_call.1} parent=43 // pred_check
          %p418 = pneg %p417
        $region62: #{tpu_custom_call.1} parent=43 // pred_check_branch
          %420 = sbr.rel (%p418) target = $region64
        $region63: #{tpu_custom_call.1} parent=43 // pred_region
          %v421 = vld [vmem:[%s347] sm:$0xff]
          %v422 = vld [vmem:[%s347 + $0x8] sm:$0xff]
          %v423 = vld [vmem:[#allocation10] sm:$0xff]
          %v424 = vld [vmem:[#allocation10 + $0x8] sm:$0xff]
          %v425 = vld [vmem:[#allocation10 + $0x10] sm:$0xff]
          %v426 = vld [vmem:[#allocation10 + $0x18] sm:$0xff]
          %v427 = vld [vmem:[%s4] sm:$0x1]
          %v429 = vperm.slane %v427, 0
          %vm431 = vcmask 261120
          %v433 = vsel %vm431, %v421, 0
          %v436 = vsel %vm431, %v422, 0
          %438 = vmatpush.msra.mxu0 0.0
          %439 = vmatpush.msra.mxu0 0.0
          %440 = vmatpush.msra.mxu0 0.0
          %441 = vmatpush.msra.mxu0 0.0
          %442 = vmatpush.msra.mxu0 0.0
          %443 = vmatpush.msra.mxu0 0.0
          %444 = vmatpush.msra.mxu0 0.0
          %445 = vmatpush.msra.mxu0 0.0
          %446 = vmatpush.msra.mxu0 0.0
          %447 = vmatpush.msra.mxu0 0.0
          %448 = vmatpush.msra.mxu0 0.0
          %449 = vmatpush.msra.mxu0 0.0
          %450 = vmatpush.msra.mxu0 %v426
          %451 = vmatpush.msra.mxu0 %v425
          %452 = vmatpush.msra.mxu0 %v424
          %453 = vmatpush.msra.mxu0 %v423
          %454 = vmatmul.f32.gmra.mxu0 %v433
          %v455 = vpop.f32.mrf.mxu0
          %v456 = vadd.f32 %v429, %v455
          %457 = vmatmul.f32.gmra.mxu0 %v436
          %v458 = vpop.f32.mrf.mxu0
          %v459 = vadd.f32 %v429, %v458
          %460 = vdwg.mxu0
          %461 = vst.msk [vmem:[#allocation2] sm:$0xff] %vm431, %v456
          %462 = vst.msk [vmem:[#allocation2 + $0x8] sm:$0xff] %vm431, %v459
          %vm463 = vcmask 130048
          %464 = vst.msk [vmem:[#allocation3] sm:$0xff] %vm463, -1e+30
          %465 = vst.msk [vmem:[#allocation3 + $0x8] sm:$0xff] %vm463, -1e+30
          %466 = vst.msk [vmem:[#allocation3 + $0x10] sm:$0xff] %vm463, -1e+30
          %467 = vst.msk [vmem:[#allocation3 + $0x18] sm:$0xff] %vm463, -1e+30
          %468 = vst.msk [vmem:[#allocation3 + $0x20] sm:$0xff] %vm463, -1e+30
          %469 = vst.msk [vmem:[#allocation3 + $0x28] sm:$0xff] %vm463, -1e+30
          %470 = vst.msk [vmem:[#allocation3 + $0x30] sm:$0xff] %vm463, -1e+30
          %471 = vst.msk [vmem:[#allocation3 + $0x38] sm:$0xff] %vm463, -1e+30
          %472 = vst.msk [vmem:[#allocation3 + $0x40] sm:$0xff] %vm463, -1e+30
          %473 = vst.msk [vmem:[#allocation3 + $0x48] sm:$0xff] %vm463, -1e+30
          %474 = vst.msk [vmem:[#allocation3 + $0x50] sm:$0xff] %vm463, -1e+30
          %475 = vst.msk [vmem:[#allocation3 + $0x58] sm:$0xff] %vm463, -1e+30
          %476 = vst.msk [vmem:[#allocation3 + $0x60] sm:$0xff] %vm463, -1e+30
          %477 = vst.msk [vmem:[#allocation3 + $0x68] sm:$0xff] %vm463, -1e+30
          %478 = vst.msk [vmem:[#allocation3 + $0x70] sm:$0xff] %vm463, -1e+30
          %479 = vst.msk [vmem:[#allocation3 + $0x78] sm:$0xff] %vm463, -1e+30
        $region64: #{tpu_custom_call.1} parent=43 // pred_fallthru
          _
        %v480 = vld [vmem:[%s357] sm:$0xff]
        %v481 = vld [vmem:[%s357 + $0x8] sm:$0xff]
        %v482 = vld [vmem:[%s357 + $0x10] sm:$0xff]
        %v483 = vld [vmem:[%s357 + $0x18] sm:$0xff]
        %v484 = vld [vmem:[%s357 + $0x20] sm:$0xff]
        %v485 = vld [vmem:[%s357 + $0x28] sm:$0xff]
        %v486 = vld [vmem:[%s357 + $0x30] sm:$0xff]
        %v487 = vld [vmem:[%s357 + $0x38] sm:$0xff]
        %v488 = vld [vmem:[%s357 + $0x40] sm:$0xff]
        %v489 = vld [vmem:[%s357 + $0x48] sm:$0xff]
        %v490 = vld [vmem:[%s357 + $0x50] sm:$0xff]
        %v491 = vld [vmem:[%s357 + $0x58] sm:$0xff]
        %v492 = vld [vmem:[%s357 + $0x60] sm:$0xff]
        %v493 = vld [vmem:[%s357 + $0x68] sm:$0xff]
        %v494 = vld [vmem:[%s357 + $0x70] sm:$0xff]
        %v495 = vld [vmem:[%s357 + $0x78] sm:$0xff]
        %v496 = vld [vmem:[%s357 + $0x80] sm:$0xff]
        %v497 = vld [vmem:[%s357 + $0x88] sm:$0xff]
        %v498 = vld [vmem:[%s357 + $0x90] sm:$0xff]
        %v499 = vld [vmem:[%s357 + $0x98] sm:$0xff]
        %v500 = vld [vmem:[%s357 + $0xa0] sm:$0xff]
        %v501 = vld [vmem:[%s357 + $0xa8] sm:$0xff]
        %v502 = vld [vmem:[%s357 + $0xb0] sm:$0xff]
        %v503 = vld [vmem:[%s357 + $0xb8] sm:$0xff]
        %v504 = vld [vmem:[%s357 + $0xc0] sm:$0xff]
        %v505 = vld [vmem:[%s357 + $0xc8] sm:$0xff]
        %v506 = vld [vmem:[%s357 + $0xd0] sm:$0xff]
        %v507 = vld [vmem:[%s357 + $0xd8] sm:$0xff]
        %v508 = vld [vmem:[%s357 + $0xe0] sm:$0xff]
        %v509 = vld [vmem:[%s357 + $0xe8] sm:$0xff]
        %v510 = vld [vmem:[%s357 + $0xf0] sm:$0xff]
        %v511 = vld [vmem:[%s357 + $0xf8] sm:$0xff]
        %v512 = vld [vmem:[%s357 + $0x100] sm:$0xff]
        %v513 = vld [vmem:[%s357 + $0x108] sm:$0xff]
        %v514 = vld [vmem:[%s357 + $0x110] sm:$0xff]
        %v515 = vld [vmem:[%s357 + $0x118] sm:$0xff]
        %v516 = vld [vmem:[%s357 + $0x120] sm:$0xff]
        %v517 = vld [vmem:[%s357 + $0x128] sm:$0xff]
        %v518 = vld [vmem:[%s357 + $0x130] sm:$0xff]
        %v519 = vld [vmem:[%s357 + $0x138] sm:$0xff]
        %v520 = vld [vmem:[%s357 + $0x140] sm:$0xff]
        %v521 = vld [vmem:[%s357 + $0x148] sm:$0xff]
        %v522 = vld [vmem:[%s357 + $0x150] sm:$0xff]
        %v523 = vld [vmem:[%s357 + $0x158] sm:$0xff]
        %v524 = vld [vmem:[%s357 + $0x160] sm:$0xff]
        %v525 = vld [vmem:[%s357 + $0x168] sm:$0xff]
        %v526 = vld [vmem:[%s357 + $0x170] sm:$0xff]
        %v527 = vld [vmem:[%s357 + $0x178] sm:$0xff]
        %v528 = vld [vmem:[#allocation2] sm:$0xff]
        %v529 = vld [vmem:[#allocation2 + $0x8] sm:$0xff]
        %v530 = vadd.f32 %v480, %v528
        %v531 = vadd.f32 %v481, %v529
        %v532 = vadd.f32 %v482, %v528
        %v533 = vadd.f32 %v483, %v529
        %v534 = vadd.f32 %v484, %v528
        %v535 = vadd.f32 %v485, %v529
        %v536 = vadd.f32 %v486, %v528
        %v537 = vadd.f32 %v487, %v529
        %v538 = vadd.f32 %v488, %v528
        %v539 = vadd.f32 %v489, %v529
        %v540 = vadd.f32 %v490, %v528
        %v541 = vadd.f32 %v491, %v529
        %v542 = vadd.f32 %v492, %v528
        %v543 = vadd.f32 %v493, %v529
        %v544 = vadd.f32 %v494, %v528
        %v545 = vadd.f32 %v495, %v529
        %v546 = vadd.f32 %v496, %v528
        %v547 = vadd.f32 %v497, %v529
        %v548 = vadd.f32 %v498, %v528
        %v549 = vadd.f32 %v499, %v529
        %v550 = vadd.f32 %v500, %v528
        %v551 = vadd.f32 %v501, %v529
        %v552 = vadd.f32 %v502, %v528
        %v553 = vadd.f32 %v503, %v529
        %v554 = vadd.f32 %v504, %v528
        %v555 = vadd.f32 %v505, %v529
        %v556 = vadd.f32 %v506, %v528
        %v557 = vadd.f32 %v507, %v529
        %v558 = vadd.f32 %v508, %v528
        %v559 = vadd.f32 %v509, %v529
        %v560 = vadd.f32 %v510, %v528
        %v561 = vadd.f32 %v511, %v529
        %v562 = vadd.f32 %v512, %v528
        %v563 = vadd.f32 %v513, %v529
        %v564 = vadd.f32 %v514, %v528
        %v565 = vadd.f32 %v515, %v529
        %v566 = vadd.f32 %v516, %v528
        %v567 = vadd.f32 %v517, %v529
        %v568 = vadd.f32 %v518, %v528
        %v569 = vadd.f32 %v519, %v529
        %v570 = vadd.f32 %v520, %v528
        %v571 = vadd.f32 %v521, %v529
        %v572 = vadd.f32 %v522, %v528
        %v573 = vadd.f32 %v523, %v529
        %v574 = vadd.f32 %v524, %v528
        %v575 = vadd.f32 %v525, %v529
        %v576 = vadd.f32 %v526, %v528
        %v577 = vadd.f32 %v527, %v529
        %v578 = vtanh.pop %v530
        %v579 = vtanh.pop %v531
        %v580 = vtanh.pop %v532
        %v581 = vtanh.pop %v533
        %v582 = vtanh.pop %v534
        %v583 = vtanh.pop %v535
        %v584 = vtanh.pop %v536
        %v585 = vtanh.pop %v537
        %v586 = vtanh.pop %v538
        %v587 = vtanh.pop %v539
        %v588 = vtanh.pop %v540
        %v589 = vtanh.pop %v541
        %v590 = vtanh.pop %v542
        %v591 = vtanh.pop %v543
        %v592 = vtanh.pop %v544
        %v593 = vtanh.pop %v545
        %v594 = vtanh.pop %v546
        %v595 = vtanh.pop %v547
        %v596 = vtanh.pop %v548
        %v597 = vtanh.pop %v549
        %v598 = vtanh.pop %v550
        %v599 = vtanh.pop %v551
        %v600 = vtanh.pop %v552
        %v601 = vtanh.pop %v553
        %v602 = vtanh.pop %v554
        %v603 = vtanh.pop %v555
        %v604 = vtanh.pop %v556
        %v605 = vtanh.pop %v557
        %v606 = vtanh.pop %v558
        %v607 = vtanh.pop %v559
        %v608 = vtanh.pop %v560
        %v609 = vtanh.pop %v561
        %v610 = vtanh.pop %v562
        %v611 = vtanh.pop %v563
        %v612 = vtanh.pop %v564
        %v613 = vtanh.pop %v565
        %v614 = vtanh.pop %v566
        %v615 = vtanh.pop %v567
        %v616 = vtanh.pop %v568
        %v617 = vtanh.pop %v569
        %v618 = vtanh.pop %v570
        %v619 = vtanh.pop %v571
        %v620 = vtanh.pop %v572
        %v621 = vtanh.pop %v573
        %v622 = vtanh.pop %v574
        %v623 = vtanh.pop %v575
        %v624 = vtanh.pop %v576
        %v625 = vtanh.pop %v577
        %v626 = vld [vmem:[%s5] sm:$0x1]
        %v628 = vperm.slane %v626, 0
        %v630 = vmul.f32 %v578, %v628
        %v631 = vmul.f32 %v579, %v628
        %v632 = vmul.f32 %v580, %v628
        %v633 = vmul.f32 %v581, %v628
        %v634 = vmul.f32 %v582, %v628
        %v635 = vmul.f32 %v583, %v628
        %v636 = vmul.f32 %v584, %v628
        %v637 = vmul.f32 %v585, %v628
        %v638 = vmul.f32 %v586, %v628
        %v639 = vmul.f32 %v587, %v628
        %v640 = vmul.f32 %v588, %v628
        %v641 = vmul.f32 %v589, %v628
        %v642 = vmul.f32 %v590, %v628
        %v643 = vmul.f32 %v591, %v628
        %v644 = vmul.f32 %v592, %v628
        %v645 = vmul.f32 %v593, %v628
        %v646 = vmul.f32 %v594, %v628
        %v647 = vmul.f32 %v595, %v628
        %v648 = vmul.f32 %v596, %v628
        %v649 = vmul.f32 %v597, %v628
        %v650 = vmul.f32 %v598, %v628
        %v651 = vmul.f32 %v599, %v628
        %v652 = vmul.f32 %v600, %v628
        %v653 = vmul.f32 %v601, %v628
        %v654 = vmul.f32 %v602, %v628
        %v655 = vmul.f32 %v603, %v628
        %v656 = vmul.f32 %v604, %v628
        %v657 = vmul.f32 %v605, %v628
        %v658 = vmul.f32 %v606, %v628
        %v659 = vmul.f32 %v607, %v628
        %v660 = vmul.f32 %v608, %v628
        %v661 = vmul.f32 %v609, %v628
        %v662 = vmul.f32 %v610, %v628
        %v663 = vmul.f32 %v611, %v628
        %v664 = vmul.f32 %v612, %v628
        %v665 = vmul.f32 %v613, %v628
        %v666 = vmul.f32 %v614, %v628
        %v667 = vmul.f32 %v615, %v628
        %v668 = vmul.f32 %v616, %v628
        %v669 = vmul.f32 %v617, %v628
        %v670 = vmul.f32 %v618, %v628
        %v671 = vmul.f32 %v619, %v628
        %v672 = vmul.f32 %v620, %v628
        %v673 = vmul.f32 %v621, %v628
        %v674 = vmul.f32 %v622, %v628
        %v675 = vmul.f32 %v623, %v628
        %v676 = vmul.f32 %v624, %v628
        %v677 = vmul.f32 %v625, %v628
        %vm678 = vcmask 261120
        %v679 = vsel %vm678, %v630, 0.0
        %680 = vadd.xlane.f32.xlu0 %v679
        %v681 = vpop.xlane.xlu0 %680
        %v682 = vsel %vm678, %v631, 0.0
        %683 = vadd.xlane.f32.xlu0 %v682
        %v684 = vpop.xlane.xlu0 %683
        %v685 = vsel %vm678, %v632, 0.0
        %686 = vadd.xlane.f32.xlu0 %v685
        %v687 = vpop.xlane.xlu0 %686
        %v688 = vsel %vm678, %v633, 0.0
        %689 = vadd.xlane.f32.xlu0 %v688
        %v690 = vpop.xlane.xlu0 %689
        %v691 = vsel %vm678, %v634, 0.0
        %692 = vadd.xlane.f32.xlu0 %v691
        %v693 = vpop.xlane.xlu0 %692
        %v694 = vsel %vm678, %v635, 0.0
        %695 = vadd.xlane.f32.xlu0 %v694
        %v696 = vpop.xlane.xlu0 %695
        %v697 = vsel %vm678, %v636, 0.0
        %698 = vadd.xlane.f32.xlu0 %v697
        %v699 = vpop.xlane.xlu0 %698
        %v700 = vsel %vm678, %v637, 0.0
        %701 = vadd.xlane.f32.xlu0 %v700
        %v702 = vpop.xlane.xlu0 %701
        %v703 = vsel %vm678, %v638, 0.0
        %704 = vadd.xlane.f32.xlu0 %v703
        %v705 = vpop.xlane.xlu0 %704
        %v706 = vsel %vm678, %v639, 0.0
        %707 = vadd.xlane.f32.xlu0 %v706
        %v708 = vpop.xlane.xlu0 %707
        %v709 = vsel %vm678, %v640, 0.0
        %710 = vadd.xlane.f32.xlu0 %v709
        %v711 = vpop.xlane.xlu0 %710
        %v712 = vsel %vm678, %v641, 0.0
        %713 = vadd.xlane.f32.xlu0 %v712
        %v714 = vpop.xlane.xlu0 %713
        %v715 = vsel %vm678, %v642, 0.0
        %716 = vadd.xlane.f32.xlu0 %v715
        %v717 = vpop.xlane.xlu0 %716
        %v718 = vsel %vm678, %v643, 0.0
        %719 = vadd.xlane.f32.xlu0 %v718
        %v720 = vpop.xlane.xlu0 %719
        %v721 = vsel %vm678, %v644, 0.0
        %722 = vadd.xlane.f32.xlu0 %v721
        %v723 = vpop.xlane.xlu0 %722
        %v724 = vsel %vm678, %v645, 0.0
        %725 = vadd.xlane.f32.xlu0 %v724
        %v726 = vpop.xlane.xlu0 %725
        %v727 = vsel %vm678, %v646, 0.0
        %728 = vadd.xlane.f32.xlu0 %v727
        %v729 = vpop.xlane.xlu0 %728
        %v730 = vsel %vm678, %v647, 0.0
        %731 = vadd.xlane.f32.xlu0 %v730
        %v732 = vpop.xlane.xlu0 %731
        %v733 = vsel %vm678, %v648, 0.0
        %734 = vadd.xlane.f32.xlu0 %v733
        %v735 = vpop.xlane.xlu0 %734
        %v736 = vsel %vm678, %v649, 0.0
        %737 = vadd.xlane.f32.xlu0 %v736
        %v738 = vpop.xlane.xlu0 %737
        %v739 = vsel %vm678, %v650, 0.0
        %740 = vadd.xlane.f32.xlu0 %v739
        %v741 = vpop.xlane.xlu0 %740
        %v742 = vsel %vm678, %v651, 0.0
        %743 = vadd.xlane.f32.xlu0 %v742
        %v744 = vpop.xlane.xlu0 %743
        %v745 = vsel %vm678, %v652, 0.0
        %746 = vadd.xlane.f32.xlu0 %v745
        %v747 = vpop.xlane.xlu0 %746
        %v748 = vsel %vm678, %v653, 0.0
        %749 = vadd.xlane.f32.xlu0 %v748
        %v750 = vpop.xlane.xlu0 %749
        %v751 = vsel %vm678, %v654, 0.0
        %752 = vadd.xlane.f32.xlu0 %v751
        %v753 = vpop.xlane.xlu0 %752
        %v754 = vsel %vm678, %v655, 0.0
        %755 = vadd.xlane.f32.xlu0 %v754
        %v756 = vpop.xlane.xlu0 %755
        %v757 = vsel %vm678, %v656, 0.0
        %758 = vadd.xlane.f32.xlu0 %v757
        %v759 = vpop.xlane.xlu0 %758
        %v760 = vsel %vm678, %v657, 0.0
        %761 = vadd.xlane.f32.xlu0 %v760
        %v762 = vpop.xlane.xlu0 %761
        %v763 = vsel %vm678, %v658, 0.0
        %764 = vadd.xlane.f32.xlu0 %v763
        %v765 = vpop.xlane.xlu0 %764
        %v766 = vsel %vm678, %v659, 0.0
        %767 = vadd.xlane.f32.xlu0 %v766
        %v768 = vpop.xlane.xlu0 %767
        %v769 = vsel %vm678, %v660, 0.0
        %770 = vadd.xlane.f32.xlu0 %v769
        %v771 = vpop.xlane.xlu0 %770
        %v772 = vsel %vm678, %v661, 0.0
        %773 = vadd.xlane.f32.xlu0 %v772
        %v774 = vpop.xlane.xlu0 %773
        %v775 = vsel %vm678, %v662, 0.0
        %776 = vadd.xlane.f32.xlu0 %v775
        %v777 = vpop.xlane.xlu0 %776
        %v778 = vsel %vm678, %v663, 0.0
        %779 = vadd.xlane.f32.xlu0 %v778
        %v780 = vpop.xlane.xlu0 %779
        %v781 = vsel %vm678, %v664, 0.0
        %782 = vadd.xlane.f32.xlu0 %v781
        %v783 = vpop.xlane.xlu0 %782
        %v784 = vsel %vm678, %v665, 0.0
        %785 = vadd.xlane.f32.xlu0 %v784
        %v786 = vpop.xlane.xlu0 %785
        %v787 = vsel %vm678, %v666, 0.0
        %788 = vadd.xlane.f32.xlu0 %v787
        %v789 = vpop.xlane.xlu0 %788
        %v790 = vsel %vm678, %v667, 0.0
        %791 = vadd.xlane.f32.xlu0 %v790
        %v792 = vpop.xlane.xlu0 %791
        %v793 = vsel %vm678, %v668, 0.0
        %794 = vadd.xlane.f32.xlu0 %v793
        %v795 = vpop.xlane.xlu0 %794
        %v796 = vsel %vm678, %v669, 0.0
        %797 = vadd.xlane.f32.xlu0 %v796
        %v798 = vpop.xlane.xlu0 %797
        %v799 = vsel %vm678, %v670, 0.0
        %800 = vadd.xlane.f32.xlu0 %v799
        %v801 = vpop.xlane.xlu0 %800
        %v802 = vsel %vm678, %v671, 0.0
        %803 = vadd.xlane.f32.xlu0 %v802
        %v804 = vpop.xlane.xlu0 %803
        %v805 = vsel %vm678, %v672, 0.0
        %806 = vadd.xlane.f32.xlu0 %v805
        %v807 = vpop.xlane.xlu0 %806
        %v808 = vsel %vm678, %v673, 0.0
        %809 = vadd.xlane.f32.xlu0 %v808
        %v810 = vpop.xlane.xlu0 %809
        %v811 = vsel %vm678, %v674, 0.0
        %812 = vadd.xlane.f32.xlu0 %v811
        %v813 = vpop.xlane.xlu0 %812
        %v814 = vsel %vm678, %v675, 0.0
        %815 = vadd.xlane.f32.xlu0 %v814
        %v816 = vpop.xlane.xlu0 %815
        %v817 = vsel %vm678, %v676, 0.0
        %818 = vadd.xlane.f32.xlu0 %v817
        %v819 = vpop.xlane.xlu0 %818
        %v820 = vsel %vm678, %v677, 0.0
        %821 = vadd.xlane.f32.xlu0 %v820
        %v822 = vpop.xlane.xlu0 %821
        %s823 = smul.u32 %s32, 24
        %v872 = vlaneseq
        %v873 = vand.u32 %v872, 127
        %v874 = vperm.slane %v681, %v873
        %v875 = vadd.s32 %v873, 4294967288
        %v876 = vperm.slane %v684, %v875
        %vm877 = vcmask 130112
        %v878 = vsel %vm877, %v876, %v874
        %v879 = vperm.slane %v687, %v873
        %v880 = vperm.slane %v690, %v875
        %v881 = vsel %vm877, %v880, %v879
        %v882 = vperm.slane %v693, %v873
        %v883 = vperm.slane %v696, %v875
        %v884 = vsel %vm877, %v883, %v882
        %v885 = vperm.slane %v699, %v873
        %v886 = vperm.slane %v702, %v875
        %v887 = vsel %vm877, %v886, %v885
        %v888 = vperm.slane %v705, %v873
        %v889 = vperm.slane %v708, %v875
        %v890 = vsel %vm877, %v889, %v888
        %v891 = vperm.slane %v711, %v873
        %v892 = vperm.slane %v714, %v875
        %v893 = vsel %vm877, %v892, %v891
        %v894 = vperm.slane %v717, %v873
        %v895 = vperm.slane %v720, %v875
        %v896 = vsel %vm877, %v895, %v894
        %v897 = vperm.slane %v723, %v873
        %v898 = vperm.slane %v726, %v875
        %v899 = vsel %vm877, %v898, %v897
        %v900 = vperm.slane %v729, %v873
        %v901 = vperm.slane %v732, %v875
        %v902 = vsel %vm877, %v901, %v900
        %v903 = vperm.slane %v735, %v873
        %v904 = vperm.slane %v738, %v875
        %v905 = vsel %vm877, %v904, %v903
        %v906 = vperm.slane %v741, %v873
        %v907 = vperm.slane %v744, %v875
        %v908 = vsel %vm877, %v907, %v906
        %v909 = vperm.slane %v747, %v873
        %v910 = vperm.slane %v750, %v875
        %v911 = vsel %vm877, %v910, %v909
        %v912 = vperm.slane %v753, %v873
        %v913 = vperm.slane %v756, %v875
        %v914 = vsel %vm877, %v913, %v912
        %v915 = vperm.slane %v759, %v873
        %v916 = vperm.slane %v762, %v875
        %v917 = vsel %vm877, %v916, %v915
        %v918 = vperm.slane %v765, %v873
        %v919 = vperm.slane %v768, %v875
        %v920 = vsel %vm877, %v919, %v918
        %v921 = vperm.slane %v771, %v873
        %v922 = vperm.slane %v774, %v875
        %v923 = vsel %vm877, %v922, %v921
        %v924 = vperm.slane %v777, %v873
        %v925 = vperm.slane %v780, %v875
        %v926 = vsel %vm877, %v925, %v924
        %v927 = vperm.slane %v783, %v873
        %v928 = vperm.slane %v786, %v875
        %v929 = vsel %vm877, %v928, %v927
        %v930 = vperm.slane %v789, %v873
        %v931 = vperm.slane %v792, %v875
        %v932 = vsel %vm877, %v931, %v930
        %v933 = vperm.slane %v795, %v873
        %v934 = vperm.slane %v798, %v875
        %v935 = vsel %vm877, %v934, %v933
        %v936 = vperm.slane %v801, %v873
        %v937 = vperm.slane %v804, %v875
        %v938 = vsel %vm877, %v937, %v936
        %v939 = vperm.slane %v807, %v873
        %v940 = vperm.slane %v810, %v875
        %v941 = vsel %vm877, %v940, %v939
        %v942 = vperm.slane %v813, %v873
        %v943 = vperm.slane %v816, %v875
        %v944 = vsel %vm877, %v943, %v942
        %v945 = vperm.slane %v819, %v873
        %v946 = vperm.slane %v822, %v875
        %v947 = vsel %vm877, %v946, %v945
        %vm948 = vcmask 1041409
        %v949 = vsel %vm948, %v881, %v878
        %vm950 = vcmask 1042434
        %v951 = vsel %vm950, %v884, %v949
        %vm952 = vcmask 1043459
        %v953 = vsel %vm952, %v887, %v951
        %vm954 = vcmask 1044484
        %v955 = vsel %vm954, %v890, %v953
        %vm956 = vcmask 1045509
        %v957 = vsel %vm956, %v893, %v955
        %vm958 = vcmask 1046534
        %v959 = vsel %vm958, %v896, %v957
        %vm960 = vcmask 1047559
        %v961 = vsel %vm960, %v899, %v959
        %v962 = vsel %vm948, %v905, %v902
        %v963 = vsel %vm950, %v908, %v962
        %v964 = vsel %vm952, %v911, %v963
        %v965 = vsel %vm954, %v914, %v964
        %v966 = vsel %vm956, %v917, %v965
        %v967 = vsel %vm958, %v920, %v966
        %v968 = vsel %vm960, %v923, %v967
        %v969 = vsel %vm948, %v929, %v926
        %v970 = vsel %vm950, %v932, %v969
        %v971 = vsel %vm952, %v935, %v970
        %v972 = vsel %vm954, %v938, %v971
        %v973 = vsel %vm956, %v941, %v972
        %v974 = vsel %vm958, %v944, %v973
        %v975 = vsel %vm960, %v947, %v974
        %s979 = scalar_lea.vmem [#allocation3], %s823
        %vm980 = vcmask 130048
        %981 = vst.msk [vmem:[%s979] sm:$0xff] %vm980, %v961
        %982 = vst.msk [vmem:[%s979 + $0x8] sm:$0xff] %vm980, %v968
        %983 = vst.msk [vmem:[%s979 + $0x10] sm:$0xff] %vm980, %v975
        // Predicated region
        $region65: #{tpu_custom_call.1} parent=43 // pred_check
          %p984 = pneg %p417
        $region66: #{tpu_custom_call.1} parent=43 // pred_check_branch
          %986 = sbr.rel (%p984) target = $region68
        $region67: #{tpu_custom_call.1} parent=43 // pred_region
          %v987 = vld [vmem:[#allocation3] sm:$0xff]
          %v988 = vld [vmem:[#allocation3 + $0x8] sm:$0xff]
          %v989 = vld [vmem:[#allocation3 + $0x10] sm:$0xff]
          %v990 = vld [vmem:[#allocation3 + $0x18] sm:$0xff]
          %v991 = vld [vmem:[#allocation3 + $0x20] sm:$0xff]
          %v992 = vld [vmem:[#allocation3 + $0x28] sm:$0xff]
          %v993 = vld [vmem:[#allocation3 + $0x30] sm:$0xff]
          %v994 = vld [vmem:[#allocation3 + $0x38] sm:$0xff]
          %v995 = vld [vmem:[#allocation3 + $0x40] sm:$0xff]
          %v996 = vld [vmem:[#allocation3 + $0x48] sm:$0xff]
          %v997 = vld [vmem:[#allocation3 + $0x50] sm:$0xff]
          %v998 = vld [vmem:[#allocation3 + $0x58] sm:$0xff]
          %v999 = vld [vmem:[#allocation3 + $0x60] sm:$0xff]
          %v1000 = vld [vmem:[#allocation3 + $0x68] sm:$0xff]
          %v1001 = vld [vmem:[#allocation3 + $0x70] sm:$0xff]
          %v1002 = vld [vmem:[#allocation3 + $0x78] sm:$0xff]
          %1003 = vxpose.xlu0.b32.start [1/16] %v987, 128
          %1004 = vxpose.xlu0.b32.cont [2/16] %v988, 128
          %1005 = vxpose.xlu0.b32.cont [3/16] %v989, 128
          %1006 = vxpose.xlu0.b32.cont [4/16] %v990, 128
          %1007 = vxpose.xlu0.b32.cont [5/16] %v991, 128
          %1008 = vxpose.xlu0.b32.cont [6/16] %v992, 128
          %1009 = vxpose.xlu0.b32.cont [7/16] %v993, 128
          %1010 = vxpose.xlu0.b32.cont [8/16] %v994, 128
          %1011 = vxpose.xlu0.b32.cont [9/16] %v995, 128
          %1012 = vxpose.xlu0.b32.cont [10/16] %v996, 128
          %1013 = vxpose.xlu0.b32.cont [11/16] %v997, 128
          %1014 = vxpose.xlu0.b32.cont [12/16] %v998, 128
          %1015 = vxpose.xlu0.b32.cont [13/16] %v999, 128
          %1016 = vxpose.xlu0.b32.cont [14/16] %v1000, 128
          %1017 = vxpose.xlu0.b32.cont [15/16] %v1001, 128
          %1018 = vxpose.xlu0.b32.end [16/16] %v1002, 128
          %v1019 = vpop.trf.xlu0
          %v1020 = vpop.trf.xlu0
          %v1021 = vpop.trf.xlu0
          %v1022 = vpop.trf.xlu0
          %v1023 = vpop.trf.xlu0
          %v1024 = vpop.trf.xlu0
          %v1025 = vpop.trf.xlu0
          %v1026 = vpop.trf.xlu0
          %v1027 = vpop.trf.xlu0
          %v1028 = vpop.trf.xlu0
          %v1029 = vpop.trf.xlu0
          %v1030 = vpop.trf.xlu0
          %v1031 = vpop.trf.xlu0
          %v1032 = vpop.trf.xlu0
          %v1033 = vpop.trf.xlu0
          %v1034 = vpop.trf.xlu0
          %v1035 = vld [vmem:[%s367] sm:$0xff]
          %v1036 = vld [vmem:[%s367 + $0x8] sm:$0xff]
          %vm1037 = vcmp.ne.s32.totalorder %v1035, 0
          %vm1038 = vcmp.ne.s32.totalorder %v1036, 0
          %v1039 = vsel %vm1037, -1000000.0, %v1019
          %v1040 = vsel %vm1038, -1000000.0, %v1020
          %vm1041 = vcmp.ge.s32.totalorder %v873, 20
          %v1042 = vsel %vm1041, -1e+30, %v1039
          %v1043 = vsel %vm1041, -1e+30, %v1040
          %1044 = vmax.xlane.f32.xlu0 %v1042
          %v1045 = vpop.xlane.xlu0 %1044
          %1046 = vmax.xlane.f32.xlu0 %v1043
          %v1047 = vpop.xlane.xlu0 %1046
          %v1048 = vsub.f32 %v1042, %v1045
          %v1049 = vsub.f32 %v1043, %v1047
          %v1050 = vmul.f32 %v1048, 1.442695
          %v1051 = vpow.pop %v1050
          %v1052 = vmul.f32 %v1049, 1.442695
          %v1053 = vpow.pop %v1052
          %1054 = vadd.xlane.f32.xlu0 %v1051
          %v1055 = vpop.xlane.xlu0 %1054
          %1056 = vadd.xlane.f32.xlu0 %v1053
          %v1057 = vpop.xlane.xlu0 %1056
          %v1058 = vrcp.pop %v1055
          %v1059 = vmul.f32 %v1055, %v1058
          %v1060 = vsub.f32 1.0, %v1059
          %v1061 = vmul.f32 %v1058, %v1060
          %v1062 = vadd.f32 %v1058, %v1061
          %vm1063 = vweird.f32 %v1055
          %vm1064 = vweird.f32 %v1058
          %vm1065 = vmor %vm1063, %vm1064
          %v1066 = vsel %vm1065, %v1058, %v1062
          %v1067 = vand.u32 2147483647, %v1055
          %vm1068 = vcmp.eq.f32.partialorder %v1067, 8.507059e+37
          %v1069 = vand.u32 %v1055, 2147483648
          %v1070 = vor.u32 1.1754944e-38, %v1069
          %v1071 = vsel %vm1068, %v1070, %v1066
          %v1072 = vrcp.pop %v1057
          %v1073 = vmul.f32 %v1057, %v1072
          %v1074 = vsub.f32 1.0, %v1073
          %v1075 = vmul.f32 %v1072, %v1074
          %v1076 = vadd.f32 %v1072, %v1075
          %vm1077 = vweird.f32 %v1057
          %vm1078 = vweird.f32 %v1072
          %vm1079 = vmor %vm1077, %vm1078
          %v1080 = vsel %vm1079, %v1072, %v1076
          %v1081 = vand.u32 2147483647, %v1057
          %vm1082 = vcmp.eq.f32.partialorder %v1081, 8.507059e+37
          %v1083 = vand.u32 %v1057, 2147483648
          %v1084 = vor.u32 1.1754944e-38, %v1083
          %v1085 = vsel %vm1082, %v1084, %v1080
          %v1086 = vmul.f32 %v1051, %v1071
          %v1087 = vmul.f32 %v1053, %v1085
          %1088 = vst [vmem:[%s411] sm:$0xff] %v1086
          %1089 = vst [vmem:[%s411 + $0x8] sm:$0xff] %v1087
        $region68: #{tpu_custom_call.1} parent=43 // pred_fallthru
          _
        %s1090 = sand.u32 %s190, 1
        %s1091 = scalar_lea.sflag [#allocation6], %s1090
        %s1092 = sand.u32 %s190, 1
        %s1093 = smul.addr %s1092, 16
        %s1094 = scalar_lea.vmem [#allocation12], %s1093
        // Predicated region
        $region69: #{tpu_custom_call.1} parent=43 // pred_check
          %p1095 = pneg %p200
        $region70: #{tpu_custom_call.1} parent=43 // pred_check_branch
          %1097 = sbr.rel (%p1095) target = $region72
        $region71: #{tpu_custom_call.1} parent=43 // pred_region
          %s1098 = smul.u32 2, %s31
          %1100 = vsyncadd %s1091, 0
          %s1101 = smul.addr %s1098, 8
          %s1102 = scalar_lea.hbm %s6, %s1101
          %s1103 = sshll.u32 %s1094, 4
          %s1104 = int_to_ptr.vmem [resolvable:$true] %s1103
          %s1105 = sshll.u32 %s1102, 4
          %s1106 = int_to_ptr.hbm [resolvable:$true] %s1105
          %1111 = dma.vmem_to_hbm [thread:$0]  %s1104, 256, %s1106, %s1091, 128, 128, 8
        $region72: #{tpu_custom_call.1} parent=43 // pred_fallthru
          _
      $region44: #{tpu_custom_call.1} parent=5 // pred_fallthru
        _
      %p1112 = scmp.le.s32.totalorder 2, %s22
      // Predicated region
      $region73: #{tpu_custom_call.1} parent=5 // pred_check
        %p1113 = pneg %p1112
      $region74: #{tpu_custom_call.1} parent=5 // pred_check_branch
        %1115 = sbr.rel (%p1113) target = $region76
      $region75: #{tpu_custom_call.1} parent=5 // pred_region
        %s1116 = ssub.s32 %s22, 2
        // Predicated region
        $region77: #{tpu_custom_call.1} parent=75 // pred_check
          %p1117 = pneg %p206
        $region78: #{tpu_custom_call.1} parent=75 // pred_check_branch
          %1119 = sbr.rel (%p1117) target = $region80
        $region79: #{tpu_custom_call.1} parent=75 // pred_region
          %s1120 = sand.u32 %s191, 1
          %s1121 = scalar_lea.sflag [#allocation6], %s1120
          %s1122 = sand.u32 %s191, 1
          %s1123 = smul.addr %s1122, 16
          %s1124 = scalar_lea.vmem [#allocation12], %s1123
          %1126 = dma.done %s1121, 256
        $region80: #{tpu_custom_call.1} parent=75 // pred_fallthru
          _
      $region76: #{tpu_custom_call.1} parent=5 // pred_fallthru
        _
    $region6: #{tpu_custom_call.1} parent=1 // loop_footer
      %s26 = sadd.s32 1, %s22
    $region7: #{tpu_custom_call.1} parent=1 // loop_footer_branch
      %21 = sbr.rel target = $region3
    $region8: #{tpu_custom_call.1} parent=1 // loop_exit
      _
    %1127 = vsyncpa [#allocation5], 1
    %s1128 = scalar_lea.sflag [#allocation5], 1
    %1129 = vsyncpa %s1128, 1
    %1130 = vsyncpa [#allocation8], 1
    %s1131 = scalar_lea.sflag [#allocation8], 1
    %1132 = vsyncpa %s1131, 1
    %1133 = vsyncpa [#allocation11], 1
    %1134 = vsyncpa [#allocation6], 1
    %s1135 = scalar_lea.sflag [#allocation6], 1
    %1136 = vsyncpa %s1135, 1

</llo_original>
